<compile_context>
chip_gen: v7x
topology: tpu7x:2x2x1
jax: 0.10.0
libtpu: 0.0.40
codegen_flags: <defaults>
</compile_context>

<pallas_src>
import math

import jax
import jax.numpy as jnp
from jax.experimental import pallas as pl
from jax.experimental.pallas import tpu as pltpu

VOCAB = 1536          # decoder output size fixed by the module
LN_EPS = 1e-12        # BERT-style default layer_norm_eps


def _mlm_head_kernel(x_ref, w1_ref, b1_ref, g_ref, beta_ref, w2_ref, b2_ref,
                     o_ref):
    # x_ref:    [tm, H]      tile of rows
    # w1_ref:   [H, H]       dense weight, (in, out) layout: h = x @ w1
    # b1_ref:   [1, H]
    # g_ref:    [1, H]       LayerNorm gamma
    # beta_ref: [1, H]       LayerNorm beta
    # w2_ref:   [H, VOCAB]   decoder weight: y = h @ w2
    # b2_ref:   [1, VOCAB]   shared decoder bias Parameter
    # o_ref:    [tm, VOCAB]

    # Dense (MXU, f32 accumulation; no f32 materialization of the weight tile)
    h = jnp.dot(x_ref[...], w1_ref[...],
                preferred_element_type=jnp.float32)
    h = h + b1_ref[...].astype(jnp.float32)

    # gelu (exact erf form, matching the PyTorch reference)
    h = h * 0.5 * (1.0 + jax.lax.erf(h * jnp.float32(1.0 / math.sqrt(2.0))))

    # LayerNorm over the hidden axis (statistics in f32)
    mean = jnp.mean(h, axis=-1, keepdims=True)
    centered = h - mean
    var = jnp.mean(centered * centered, axis=-1, keepdims=True)
    h = centered * jax.lax.rsqrt(var + jnp.float32(LN_EPS))
    h = h * g_ref[...].astype(jnp.float32) + beta_ref[...].astype(jnp.float32)

    # Decoder + bias (feed the MXU in the weight dtype; accumulate in f32)
    y = jnp.dot(h.astype(w2_ref.dtype), w2_ref[...],
                preferred_element_type=jnp.float32)
    y = y + b2_ref[...].astype(jnp.float32)
    o_ref[...] = y.astype(o_ref.dtype)


def _round_up(n, m):
    return ((n + m - 1) // m) * m


def visual_only_mlm_head(x, params, *, tm=256):
    """x: [B, S, H] float32. Returns [B, S, VOCAB] float32."""
    B, S, H = x.shape
    N = B * S

    w1, b1, gamma, beta, w2, b2 = params
    b1 = b1.reshape(1, H)
    gamma = gamma.reshape(1, H)
    beta = beta.reshape(1, H)
    b2 = b2.reshape(1, VOCAB)

    # Effective row tile: big (default 256) for MXU utilization, clamped for
    # small problems, always a multiple of 8 (sublane granularity).
    tm_eff = _round_up(min(tm, _round_up(N, 8)), 8)
    n_pad = _round_up(N, tm_eff)

    x2 = x.reshape(N, H)
    if n_pad != N:
        # Zero-pad ragged tail rows; padded outputs are sliced away below.
        x2 = jnp.pad(x2, ((0, n_pad - N), (0, 0)))

    grid = (n_pad // tm_eff,)

    # Explicit VMEM budget: single-buffered weights + double-buffered I/O
    # tiles + intermediate headroom. Capped at 64 MiB (v7x physical VMEM).
    wbytes = ((H * H + H * VOCAB) * jnp.dtype(w1.dtype).itemsize
              + (3 * H + VOCAB) * 4)
    io_bytes = 2 * tm_eff * (H + VOCAB) * jnp.dtype(x.dtype).itemsize
    scratch_bytes = 6 * tm_eff * max(H, VOCAB) * 4
    vmem_limit = int(min(max(1.25 * (wbytes + io_bytes + scratch_bytes),
                             16 << 20), 64 << 20))

    cost = pl.CostEstimate(
        flops=2 * n_pad * H * (H + VOCAB),
        transcendentals=n_pad * H,
        bytes_accessed=int(wbytes + n_pad * (H + VOCAB)
                           * jnp.dtype(x.dtype).itemsize),
    )

    # Constant-index blocks (weights / biases / LN params) never change across
    # the grid -> single-buffer them so they occupy VMEM once.
    def const_spec(shape):
        return pl.BlockSpec(shape, lambda i: (0, 0),
                            pipeline_mode=pl.Buffered(1))

    out = pl.pallas_call(
        _mlm_head_kernel,
        out_shape=jax.ShapeDtypeStruct((n_pad, VOCAB), x.dtype),
        grid_spec=pltpu.PrefetchScalarGridSpec(
            num_scalar_prefetch=0,
            grid=grid,
            in_specs=[
                pl.BlockSpec((tm_eff, H), lambda i: (i, 0)),   # x rows
                const_spec((H, H)),                            # dense W
                const_spec((1, H)),                            # dense b
                const_spec((1, H)),                            # LN gamma
                const_spec((1, H)),                            # LN beta
                const_spec((H, VOCAB)),                        # decoder W
                const_spec((1, VOCAB)),                        # decoder b
            ],
            out_specs=pl.BlockSpec((tm_eff, VOCAB), lambda i: (i, 0)),
        ),
        compiler_params=pltpu.CompilerParams(
            dimension_semantics=("parallel",),
            vmem_limit_bytes=vmem_limit),
        cost_estimate=cost,
    )(x2, w1, b1, gamma, beta, w2, b2)

    if n_pad != N:
        out = out[:N]
    return out.reshape(B, S, VOCAB)


def init_params(key, hidden_size):
    """Deterministic synthetic parameters (shapes from the module __init__)."""
    k1, k2 = jax.random.split(key)
    scale1 = 1.0 / math.sqrt(hidden_size)
    # Stored directly in (in, out) orientation so the kernel does x @ W.
    w1 = jax.random.uniform(k1, (hidden_size, hidden_size), jnp.float32,
                            -scale1, scale1)
    b1 = jnp.zeros((hidden_size,), jnp.float32)
    gamma = jnp.ones((hidden_size,), jnp.float32)
    beta = jnp.zeros((hidden_size,), jnp.float32)
    w2 = jax.random.uniform(k2, (hidden_size, VOCAB), jnp.float32,
                            -scale1, scale1)
    b2 = jnp.zeros((VOCAB,), jnp.float32)   # self.bias Parameter (zeros)
    return (w1, b1, gamma, beta, w2, b2)


def reference(x, params):
    """Pure-JAX reference of the PyTorch forward for validation."""
    w1, b1, gamma, beta, w2, b2 = params
    h = x @ w1 + b1
    h = h * 0.5 * (1.0 + jax.lax.erf(h / jnp.float32(math.sqrt(2.0))))
    mean = jnp.mean(h, axis=-1, keepdims=True)
    var = jnp.mean((h - mean) ** 2, axis=-1, keepdims=True)
    h = (h - mean) * jax.lax.rsqrt(var + LN_EPS) * gamma + beta
    return h @ w2 + b2


if __name__ == "__main__":
    key = jax.random.PRNGKey(0)
    kx, kp, kx2 = jax.random.split(key, 3)

    # Case 1: B*S divides the (clamped) row tile exactly.
    B, S, H = 2, 8, 32
    x = jax.random.normal(kx, (B, S, H), jnp.float32)
    params = init_params(kp, H)

    y = visual_only_mlm_head(x, params)
    y = jax.block_until_ready(y)
    y_ref = reference(x, params)
    assert y.shape == (B, S, VOCAB)
    assert jnp.allclose(y, y_ref, atol=1e-4, rtol=1e-4), "mismatch vs reference"

    # Case 2: ragged row count -> exercises the padding path.
    B2, S2 = 2, 5
    x2 = jax.random.normal(kx2, (B2, S2, H), jnp.float32)
    y2 = jax.block_until_ready(visual_only_mlm_head(x2, params))
    y2_ref = reference(x2, params)
    assert y2.shape == (B2, S2, VOCAB)
    assert jnp.allclose(y2, y2_ref, atol=1e-4, rtol=1e-4), "mismatch (padded)"

    print("KERNEL_OK")
</pallas_src>

<mosaic_0001>
module attributes {stable_mosaic.version = 11 : i64} {
  func.func @_mlm_head_kernel(%arg0: i32, %arg1: memref<16x32xf32, #tpu.memory_space<vmem>>, %arg2: memref<32x32xf32, #tpu.memory_space<vmem>>, %arg3: memref<1x32xf32, #tpu.memory_space<vmem>>, %arg4: memref<1x32xf32, #tpu.memory_space<vmem>>, %arg5: memref<1x32xf32, #tpu.memory_space<vmem>>, %arg6: memref<32x1536xf32, #tpu.memory_space<vmem>>, %arg7: memref<1x1536xf32, #tpu.memory_space<vmem>>, %arg8: memref<16x1536xf32, #tpu.memory_space<vmem>>) attributes {dimension_semantics = [#tpu.dimension_semantics<parallel>], iteration_bounds = array<i64: 1>, scalar_prefetch = 0 : i64, scratch_operands = 0 : i64, tpu.core_type = #tpu.core_type<tc>, window_params = [{transform_indices = @transform_0, window_bounds = array<i64: 16, 32>}, {pipeline_mode = #tpu.pipeline_mode<synchronous>, transform_indices = @transform_1, window_bounds = array<i64: 32, 32>}, {pipeline_mode = #tpu.pipeline_mode<synchronous>, transform_indices = @transform_2, window_bounds = array<i64: 1, 32>}, {pipeline_mode = #tpu.pipeline_mode<synchronous>, transform_indices = @transform_3, window_bounds = array<i64: 1, 32>}, {pipeline_mode = #tpu.pipeline_mode<synchronous>, transform_indices = @transform_4, window_bounds = array<i64: 1, 32>}, {pipeline_mode = #tpu.pipeline_mode<synchronous>, transform_indices = @transform_5, window_bounds = array<i64: 32, 1536>}, {pipeline_mode = #tpu.pipeline_mode<synchronous>, transform_indices = @transform_6, window_bounds = array<i64: 1, 1536>}, {transform_indices = @transform_7, window_bounds = array<i64: 16, 1536>}]} {
    %c0 = arith.constant 0 : index
    %c0_0 = arith.constant 0 : index
    %0 = vector.load %arg1[%c0, %c0_0] : memref<16x32xf32, #tpu.memory_space<vmem>>, vector<16x32xf32>
    %c0_1 = arith.constant 0 : index
    %c0_2 = arith.constant 0 : index
    %1 = vector.load %arg2[%c0_1, %c0_2] : memref<32x32xf32, #tpu.memory_space<vmem>>, vector<32x32xf32>
    %cst = arith.constant dense<0.000000e+00> : vector<16x32xf32>
    %2 = tpu.matmul %0, %1, %cst {dimension_numbers = #tpu.dot_dimension_numbers<[1], [0], [0], [1], [0, 0, 1, 1], [], []>} : vector<16x32xf32>, vector<32x32xf32>, vector<16x32xf32> -> vector<16x32xf32>
    %c0_3 = arith.constant 0 : index
    %c0_4 = arith.constant 0 : index
    %3 = vector.load %arg3[%c0_3, %c0_4] : memref<1x32xf32, #tpu.memory_space<vmem>>, vector<1x32xf32>
    %4 = vector.broadcast %3 : vector<1x32xf32> to vector<16x32xf32>
    %5 = arith.addf %2, %4 : vector<16x32xf32>
    %cst_5 = arith.constant 5.000000e-01 : f32
    %6 = vector.broadcast %cst_5 : f32 to vector<16x32xf32>
    %7 = arith.mulf %5, %6 : vector<16x32xf32>
    %cst_6 = arith.constant 0.707106769 : f32
    %8 = vector.broadcast %cst_6 : f32 to vector<16x32xf32>
    %9 = arith.mulf %5, %8 : vector<16x32xf32>
    %10 = math.erf %9 : vector<16x32xf32>
    %cst_7 = arith.constant 1.000000e+00 : f32
    %11 = vector.broadcast %cst_7 : f32 to vector<16x32xf32>
    %12 = arith.addf %11, %10 : vector<16x32xf32>
    %13 = arith.mulf %7, %12 : vector<16x32xf32>
    %cst_8 = arith.constant dense<0.000000e+00> : vector<16xf32>
    %14 = vector.multi_reduction <add>, %13, %cst_8 [1] : vector<16x32xf32> to vector<16xf32>
    %15 = vector.shape_cast %14 : vector<16xf32> to vector<16x1xf32>
    %cst_9 = arith.constant 3.200000e+01 : f32
    %16 = vector.broadcast %cst_9 : f32 to vector<16x1xf32>
    %17 = arith.divf %15, %16 : vector<16x1xf32>
    %18 = vector.broadcast %17 : vector<16x1xf32> to vector<16x32xf32>
    %19 = arith.subf %13, %18 : vector<16x32xf32>
    %20 = arith.mulf %19, %19 : vector<16x32xf32>
    %cst_10 = arith.constant dense<0.000000e+00> : vector<16xf32>
    %21 = vector.multi_reduction <add>, %20, %cst_10 [1] : vector<16x32xf32> to vector<16xf32>
    %22 = vector.shape_cast %21 : vector<16xf32> to vector<16x1xf32>
    %cst_11 = arith.constant 3.200000e+01 : f32
    %23 = vector.broadcast %cst_11 : f32 to vector<16x1xf32>
    %24 = arith.divf %22, %23 : vector<16x1xf32>
    %cst_12 = arith.constant 9.99999996E-13 : f32
    %25 = vector.broadcast %cst_12 : f32 to vector<16x1xf32>
    %26 = arith.addf %24, %25 : vector<16x1xf32>
    %27 = math.rsqrt %26 : vector<16x1xf32>
    %28 = vector.broadcast %27 : vector<16x1xf32> to vector<16x32xf32>
    %29 = arith.mulf %19, %28 : vector<16x32xf32>
    %c0_13 = arith.constant 0 : index
    %c0_14 = arith.constant 0 : index
    %30 = vector.load %arg4[%c0_13, %c0_14] : memref<1x32xf32, #tpu.memory_space<vmem>>, vector<1x32xf32>
    %31 = vector.broadcast %30 : vector<1x32xf32> to vector<16x32xf32>
    %32 = arith.mulf %29, %31 : vector<16x32xf32>
    %c0_15 = arith.constant 0 : index
    %c0_16 = arith.constant 0 : index
    %33 = vector.load %arg5[%c0_15, %c0_16] : memref<1x32xf32, #tpu.memory_space<vmem>>, vector<1x32xf32>
    %34 = vector.broadcast %33 : vector<1x32xf32> to vector<16x32xf32>
    %35 = arith.addf %32, %34 : vector<16x32xf32>
    %c0_17 = arith.constant 0 : index
    %c0_18 = arith.constant 0 : index
    %36 = vector.load %arg6[%c0_17, %c0_18] : memref<32x1536xf32, #tpu.memory_space<vmem>>, vector<32x1536xf32>
    %cst_19 = arith.constant dense<0.000000e+00> : vector<16x1536xf32>
    %37 = tpu.matmul %35, %36, %cst_19 {dimension_numbers = #tpu.dot_dimension_numbers<[1], [0], [0], [1], [0, 0, 1, 1], [], []>} : vector<16x32xf32>, vector<32x1536xf32>, vector<16x1536xf32> -> vector<16x1536xf32>
    %c0_20 = arith.constant 0 : index
    %c0_21 = arith.constant 0 : index
    %38 = vector.load %arg7[%c0_20, %c0_21] : memref<1x1536xf32, #tpu.memory_space<vmem>>, vector<1x1536xf32>
    %39 = vector.broadcast %38 : vector<1x1536xf32> to vector<16x1536xf32>
    %40 = arith.addf %37, %39 : vector<16x1536xf32>
    %c0_22 = arith.constant 0 : index
    %c0_23 = arith.constant 0 : index
    %41 = vector.load %arg8[%c0_22, %c0_23] : memref<16x1536xf32, #tpu.memory_space<vmem>>, vector<16x1536xf32>
    tpu.vector_store %arg8[%c0_22, %c0_23], %40 {strides = array<i32>} : memref<16x1536xf32, #tpu.memory_space<vmem>>, vector<16x1536xf32>,
    return
  }
  func.func @transform_0(%arg0: i32) -> (i32, i32) {
    %c0_i32 = arith.constant 0 : i32
    %c0_i32_0 = arith.constant 0 : i32
    return %arg0, %c0_i32 : i32, i32
  }
  func.func @transform_1(%arg0: i32) -> (i32, i32) {
    %c0_i32 = arith.constant 0 : i32
    %c0_i32_0 = arith.constant 0 : i32
    %c0_i32_1 = arith.constant 0 : i32
    return %c0_i32, %c0_i32_0 : i32, i32
  }
  func.func @transform_2(%arg0: i32) -> (i32, i32) {
    %c0_i32 = arith.constant 0 : i32
    %c0_i32_0 = arith.constant 0 : i32
    %c0_i32_1 = arith.constant 0 : i32
    return %c0_i32, %c0_i32_0 : i32, i32
  }
  func.func @transform_3(%arg0: i32) -> (i32, i32) {
    %c0_i32 = arith.constant 0 : i32
    %c0_i32_0 = arith.constant 0 : i32
    %c0_i32_1 = arith.constant 0 : i32
    return %c0_i32, %c0_i32_0 : i32, i32
  }
  func.func @transform_4(%arg0: i32) -> (i32, i32) {
    %c0_i32 = arith.constant 0 : i32
    %c0_i32_0 = arith.constant 0 : i32
    %c0_i32_1 = arith.constant 0 : i32
    return %c0_i32, %c0_i32_0 : i32, i32
  }
  func.func @transform_5(%arg0: i32) -> (i32, i32) {
    %c0_i32 = arith.constant 0 : i32
    %c0_i32_0 = arith.constant 0 : i32
    %c0_i32_1 = arith.constant 0 : i32
    return %c0_i32, %c0_i32_0 : i32, i32
  }
  func.func @transform_6(%arg0: i32) -> (i32, i32) {
    %c0_i32 = arith.constant 0 : i32
    %c0_i32_0 = arith.constant 0 : i32
    %c0_i32_1 = arith.constant 0 : i32
    return %c0_i32, %c0_i32_0 : i32, i32
  }
  func.func @transform_7(%arg0: i32) -> (i32, i32) {
    %c0_i32 = arith.constant 0 : i32
    %c0_i32_0 = arith.constant 0 : i32
    return %arg0, %c0_i32 : i32, i32
  }
}

</mosaic_0001>

<llo_original>
// kernel: tpu_custom_call.1
$region0: #{tpu_custom_call.1}
  #allocation0 [shape = 'u32[]', space=smem, size = 0x4, offset = 0x4, fixed_abs, tag = 'smem constant byte address 0x4 - core index']
  #allocation1 [shape = 'u32[144,128]{1,0:T(1,128)}', space=vmem, size = 0x12000, scoped, tag = 'internal scratch']
  %s0 = inlined_call_operand.hbm [shape: f32[16,32], index: 0, kind: input, shape index: {}]
  %s1 = inlined_call_operand.hbm [shape: f32[32,32], index: 1, kind: input, shape index: {}]
  %s2 = inlined_call_operand.vmem [shape: f32[1,32], index: 2, kind: input, shape index: {}]
  %s3 = inlined_call_operand.vmem [shape: f32[1,32], index: 3, kind: input, shape index: {}]
  %s4 = inlined_call_operand.vmem [shape: f32[1,32], index: 4, kind: input, shape index: {}]
  %s5 = inlined_call_operand.hbm [shape: f32[32,1536], index: 5, kind: input, shape index: {}]
  %s6 = inlined_call_operand.vmem [shape: f32[1,1536], index: 6, kind: input, shape index: {}]
  %s7 = inlined_call_operand.hbm [shape: f32[16,1536], index: 7, kind: output, shape index: {}]
  %s8 = sld [smem:[#allocation0]]
  $region50: #{tpu_custom_call.1} parent=0
    _
  %s10 = ssub.s32 1, %s8
  %s11 = scalar_select 0, %s10, %s8
  $region1: #{tpu_custom_call.1} parent=0
    #allocation2 [shape = 'u8[8192]{0}', space=vmem, size = 0x2000, scoped, tag = 'input window, operand 0, single buffered']
    #allocation3 [shape = 's32[1]{0}', space=sflag, size = 0x4, scoped, tag = 'scoped memory for tpu_custom_call.1']
    #allocation4 [shape = 's32[1]{0}', space=sflag, size = 0x4, scoped, tag = 'scoped memory for tpu_custom_call.1']
    #allocation5 [shape = 'u8[16384]{0}', space=vmem, size = 0x4000, scoped, tag = 'input window, operand 1, single buffered']
    #allocation6 [shape = 's32[1]{0}', space=sflag, size = 0x4, scoped, tag = 'scoped memory for tpu_custom_call.1']
    #allocation7 [shape = 'u8[196608]{0}', space=vmem, size = 0x30000, scoped, tag = 'input window, operand 5, single buffered']
    #allocation8 [shape = 'u8[98304]{0}', space=vmem, size = 0x18000, scoped, tag = 'output window, operand 0, single buffered']
    %12 = vsyncpa [#allocation3], 0
    %13 = vsyncpa [#allocation6], 0
    %14 = vsyncpa [#allocation4], 0
    // Predicated region
    $region2: #{tpu_custom_call.1} parent=1 // pred_check
      _
    $region3: #{tpu_custom_call.1} parent=1 // pred_check_branch
      %16 = sbr.rel (0) target = $region5
    $region4: #{tpu_custom_call.1} parent=1 // pred_region
      %s18 = ssub.s32 256, 256
      %19 = vsyncadd [#allocation3], %s18
      %s20 = sshll.u32 [#allocation2], 4
      %s21 = int_to_ptr.vmem [resolvable:$true] %s20
      %26 = dma.hbm_to_vmem [thread:$0]  %s0, 256, %s21, [#allocation3], 128, 128, 8
    $region5: #{tpu_custom_call.1} parent=1 // pred_fallthru
      _
    // Predicated region
    $region6: #{tpu_custom_call.1} parent=1 // pred_check
      _
    $region7: #{tpu_custom_call.1} parent=1 // pred_check_branch
      %28 = sbr.rel (0) target = $region9
    $region8: #{tpu_custom_call.1} parent=1 // pred_region
      %s30 = ssub.s32 512, 512
      %31 = vsyncadd [#allocation6], %s30
      %s32 = sshll.u32 [#allocation5], 4
      %s33 = int_to_ptr.vmem [resolvable:$true] %s32
      %38 = dma.hbm_to_vmem [thread:$0]  %s1, 512, %s33, [#allocation6], 128, 128, 8
    $region9: #{tpu_custom_call.1} parent=1 // pred_fallthru
      _
    // Predicated region
    $region10: #{tpu_custom_call.1} parent=1 // pred_check
      _
    $region11: #{tpu_custom_call.1} parent=1 // pred_check_branch
      %40 = sbr.rel (0) target = $region13
    $region12: #{tpu_custom_call.1} parent=1 // pred_region
      _
    $region13: #{tpu_custom_call.1} parent=1 // pred_fallthru
      _
    // Predicated region
    $region14: #{tpu_custom_call.1} parent=1 // pred_check
      _
    $region15: #{tpu_custom_call.1} parent=1 // pred_check_branch
      %42 = sbr.rel (0) target = $region17
    $region16: #{tpu_custom_call.1} parent=1 // pred_region
      _
    $region17: #{tpu_custom_call.1} parent=1 // pred_fallthru
      _
    // Predicated region
    $region18: #{tpu_custom_call.1} parent=1 // pred_check
      _
    $region19: #{tpu_custom_call.1} parent=1 // pred_check_branch
      %44 = sbr.rel (0) target = $region21
    $region20: #{tpu_custom_call.1} parent=1 // pred_region
      _
    $region21: #{tpu_custom_call.1} parent=1 // pred_fallthru
      _
    // Predicated region
    $region22: #{tpu_custom_call.1} parent=1 // pred_check
      _
    $region23: #{tpu_custom_call.1} parent=1 // pred_check_branch
      %46 = sbr.rel (0) target = $region25
    $region24: #{tpu_custom_call.1} parent=1 // pred_region
      %s48 = ssub.s32 6144, 6144
      %49 = vsyncadd [#allocation6], %s48
      %s50 = sshll.u32 [#allocation7], 4
      %s51 = int_to_ptr.vmem [resolvable:$true] %s50
      %56 = dma.hbm_to_vmem [thread:$0]  %s5, 6144, %s51, [#allocation6], 1536, 1536, 96
    $region25: #{tpu_custom_call.1} parent=1 // pred_fallthru
      _
    // Predicated region
    $region26: #{tpu_custom_call.1} parent=1 // pred_check
      _
    $region27: #{tpu_custom_call.1} parent=1 // pred_check_branch
      %58 = sbr.rel (0) target = $region29
    $region28: #{tpu_custom_call.1} parent=1 // pred_region
      _
    $region29: #{tpu_custom_call.1} parent=1 // pred_fallthru
      _
    // Predicated region
    $region30: #{tpu_custom_call.1} parent=1 // pred_check
      _
    $region31: #{tpu_custom_call.1} parent=1 // pred_check_branch
      %60 = sbr.rel (0) target = $region33
    $region32: #{tpu_custom_call.1} parent=1 // pred_region
      %61 = dma.done [#allocation3], 256
    $region33: #{tpu_custom_call.1} parent=1 // pred_fallthru
      _
    // Predicated region
    $region34: #{tpu_custom_call.1} parent=1 // pred_check
      _
    $region35: #{tpu_custom_call.1} parent=1 // pred_check_branch
      %63 = sbr.rel (0) target = $region37
    $region36: #{tpu_custom_call.1} parent=1 // pred_region
      %64 = dma.done [#allocation6], 512
    $region37: #{tpu_custom_call.1} parent=1 // pred_fallthru
      _
    // Predicated region
    $region38: #{tpu_custom_call.1} parent=1 // pred_check
      _
    $region39: #{tpu_custom_call.1} parent=1 // pred_check_branch
      %66 = sbr.rel (0) target = $region41
    $region40: #{tpu_custom_call.1} parent=1 // pred_region
      %67 = dma.done [#allocation6], 6144
    $region41: #{tpu_custom_call.1} parent=1 // pred_fallthru
      _
    %v68 = vld [vmem:[#allocation2] sm:$0xff]
    %v69 = vld [vmem:[#allocation2 + $0x8] sm:$0xff]
    %v70 = vld [vmem:[#allocation5] sm:$0xff]
    %v71 = vld [vmem:[#allocation5 + $0x8] sm:$0xff]
    %v72 = vld [vmem:[#allocation5 + $0x10] sm:$0xff]
    %v73 = vld [vmem:[#allocation5 + $0x18] sm:$0xff]
    %v74 = vld [vmem:[%s2] sm:$0x1]
    %v76 = vlaneseq
    %v77 = vshrl.u32 %v76, 7
    %v78 = vsub.s32 0, %v77
    %v79 = vrot.slane %v74, %v78
    %vm81 = vcmask 261120
    %v83 = vsel %vm81, %v68, 0
    %v86 = vsel %vm81, %v69, 0
    %88 = vmatprep.subr.mxu0 0.0
    %89 = vmatpush1.msra.mxu0 %v70
    %90 = vmatprep.subr.mxu0 0.0
    %91 = vmatpush1.msra.mxu0 %v71
    %92 = vmatprep.subr.mxu0 0.0
    %93 = vmatpush1.msra.mxu0 %v72
    %94 = vmatprep.subr.mxu0 0.0
    %95 = vmatpush1.msra.mxu0 %v73
    %96 = vmatprep.subr.mxu0 0.0
    %97 = vmatpush1.msra.mxu0 0.0
    %98 = vmatprep.subr.mxu0 0.0
    %99 = vmatpush1.msra.mxu0 0.0
    %100 = vmatprep.subr.mxu0 0.0
    %101 = vmatpush1.msra.mxu0 0.0
    %102 = vmatprep.subr.mxu0 0.0
    %103 = vmatpush1.msra.mxu0 0.0
    %104 = vmatprep.subr.mxu0 0.0
    %105 = vmatpush1.msra.mxu0 0.0
    %106 = vmatprep.subr.mxu0 0.0
    %107 = vmatpush1.msra.mxu0 0.0
    %108 = vmatprep.subr.mxu0 0.0
    %109 = vmatpush1.msra.mxu0 0.0
    %110 = vmatprep.subr.mxu0 0.0
    %111 = vmatpush1.msra.mxu0 0.0
    %112 = vmatprep.subr.mxu0 0.0
    %113 = vmatpush1.msra.mxu0 0.0
    %114 = vmatprep.subr.mxu0 0.0
    %115 = vmatpush1.msra.mxu0 0.0
    %116 = vmatprep.subr.mxu0 0.0
    %117 = vmatpush1.msra.mxu0 0.0
    %118 = vmatprep.subr.mxu0 0.0
    %119 = vmatpush1.msra.mxu0 0.0
    %120 = vmatprep.subr.mxu0 0.0
    %121 = vmatpush1.msra.mxu0 0.0
    %122 = vmatprep.subr.mxu0 0.0
    %123 = vmatpush1.msra.mxu0 0.0
    %124 = vmatprep.subr.mxu0 0.0
    %125 = vmatpush1.msra.mxu0 0.0
    %126 = vmatprep.subr.mxu0 0.0
    %127 = vmatpush1.msra.mxu0 0.0
    %128 = vmatprep.subr.mxu0 0.0
    %129 = vmatpush1.msra.mxu0 0.0
    %130 = vmatprep.subr.mxu0 0.0
    %131 = vmatpush1.msra.mxu0 0.0
    %132 = vmatprep.subr.mxu0 0.0
    %133 = vmatpush1.msra.mxu0 0.0
    %134 = vmatprep.subr.mxu0 0.0
    %135 = vmatpush1.msra.mxu0 0.0
    %136 = vmatprep.subr.mxu0 0.0
    %137 = vmatpush1.msra.mxu0 0.0
    %138 = vmatprep.subr.mxu0 0.0
    %139 = vmatpush1.msra.mxu0 0.0
    %140 = vmatprep.subr.mxu0 0.0
    %141 = vmatpush1.msra.mxu0 0.0
    %142 = vmatprep.subr.mxu0 0.0
    %143 = vmatpush1.msra.mxu0 0.0
    %144 = vmatprep.subr.mxu0 0.0
    %145 = vmatpush1.msra.mxu0 0.0
    %146 = vmatprep.subr.mxu0 0.0
    %147 = vmatpush1.msra.mxu0 0.0
    %148 = vmatprep.subr.mxu0 0.0
    %149 = vmatpush1.msra.mxu0 0.0
    %150 = vmatprep.subr.mxu0 0.0
    %151 = vmatpush1.msra.mxu0 0.0
    %152 = vmatprep.mubr.f32.mxu0 0.0
    %153 = vmatmul.mubr.f32.gmra.mrb[0].mxu0 %v83
    %v154 = vpop.f32.mrb[0].mxu0
    %v155 = vadd.f32 %v79, %v154
    %v156 = vpop.f32.mrb[0].mxu0
    %157 = vmatprep.mubr.f32.mxu0 0.0
    %158 = vmatmul.mubr.f32.gmra.mrb[0].mxu0 %v86
    %v159 = vpop.f32.mrb[0].mxu0
    %v160 = vadd.f32 %v79, %v159
    %v161 = vpop.f32.mrb[0].mxu0
    %162 = vdwg.mxu0
    %v163 = vmul.f32 %v155, 0.5
    %v164 = vmul.f32 %v160, 0.5
    %v165 = vmul.f32 %v155, 0.70710677
    %v166 = vmul.f32 %v160, 0.70710677
    %v167 = verf.f32.pop %v165
    %v168 = verf.f32.pop %v166
    %v169 = vadd.f32 %v167, 1.0
    %v170 = vadd.f32 %v168, 1.0
    %v171 = vmul.f32 %v163, %v169
    %v172 = vmul.f32 %v164, %v170
    %v173 = vsel %vm81, %v171, 0.0
    %174 = vadd.xlane.f32.xlu0 %v173
    %v175 = vpop.xlane.xlu0 %174
    %v176 = vsel %vm81, %v172, 0.0
    %177 = vadd.xlane.f32.xlu0 %v176
    %v178 = vpop.xlane.xlu0 %177
    %v179 = vrcp.pop 32.0
    %v180 = vmul.f32 %v175, %v179
    %v181 = vmul.f32 %v178, %v179
    %v182 = vsub.f32 %v171, %v180
    %v183 = vsub.f32 %v172, %v181
    %v184 = vmul.f32 %v182, %v182
    %v185 = vmul.f32 %v183, %v183
    %v186 = vsel %vm81, %v184, 0.0
    %187 = vadd.xlane.f32.xlu0 %v186
    %v188 = vpop.xlane.xlu0 %187
    %v189 = vsel %vm81, %v185, 0.0
    %190 = vadd.xlane.f32.xlu0 %v189
    %v191 = vpop.xlane.xlu0 %190
    %v192 = vmul.f32 %v188, %v179
    %v193 = vmul.f32 %v191, %v179
    %v194 = vadd.f32 %v192, 1e-12
    %v195 = vadd.f32 %v193, 1e-12
    %v196 = vrsqrt.pop %v194
    %v197 = vrsqrt.pop %v195
    %v198 = vmul.f32 %v182, %v196
    %v199 = vmul.f32 %v183, %v197
    %v200 = vld [vmem:[%s3] sm:$0x1]
    %v202 = vlaneseq
    %v203 = vshrl.u32 %v202, 7
    %v204 = vsub.s32 0, %v203
    %v205 = vrot.slane %v200, %v204
    %v207 = vmul.f32 %v198, %v205
    %v208 = vmul.f32 %v199, %v205
    %v209 = vld [vmem:[%s4] sm:$0x1]
    %v211 = vlaneseq
    %v212 = vshrl.u32 %v211, 7
    %v213 = vsub.s32 0, %v212
    %v214 = vrot.slane %v209, %v213
    %v216 = vadd.f32 %v207, %v214
    %v217 = vadd.f32 %v208, %v214
    %v218 = vld [vmem:[#allocation7] sm:$0xff]
    %v219 = vld [vmem:[#allocation7 + $0x8] sm:$0xff]
    %v220 = vld [vmem:[#allocation7 + $0x10] sm:$0xff]
    %v221 = vld [vmem:[#allocation7 + $0x18] sm:$0xff]
    %v222 = vld [vmem:[#allocation7 + $0x20] sm:$0xff]
    %v223 = vld [vmem:[#allocation7 + $0x28] sm:$0xff]
    %v224 = vld [vmem:[#allocation7 + $0x30] sm:$0xff]
    %v225 = vld [vmem:[#allocation7 + $0x38] sm:$0xff]
    %v226 = vld [vmem:[#allocation7 + $0x40] sm:$0xff]
    %v227 = vld [vmem:[#allocation7 + $0x48] sm:$0xff]
    %v228 = vld [vmem:[#allocation7 + $0x50] sm:$0xff]
    %v229 = vld [vmem:[#allocation7 + $0x58] sm:$0xff]
    %v230 = vld [vmem:[#allocation7 + $0x60] sm:$0xff]
    %v231 = vld [vmem:[#allocation7 + $0x68] sm:$0xff]
    %v232 = vld [vmem:[#allocation7 + $0x70] sm:$0xff]
    %v233 = vld [vmem:[#allocation7 + $0x78] sm:$0xff]
    %v234 = vld [vmem:[#allocation7 + $0x80] sm:$0xff]
    %v235 = vld [vmem:[#allocation7 + $0x88] sm:$0xff]
    %v236 = vld [vmem:[#allocation7 + $0x90] sm:$0xff]
    %v237 = vld [vmem:[#allocation7 + $0x98] sm:$0xff]
    %v238 = vld [vmem:[#allocation7 + $0xa0] sm:$0xff]
    %v239 = vld [vmem:[#allocation7 + $0xa8] sm:$0xff]
    %v240 = vld [vmem:[#allocation7 + $0xb0] sm:$0xff]
    %v241 = vld [vmem:[#allocation7 + $0xb8] sm:$0xff]
    %v242 = vld [vmem:[#allocation7 + $0xc0] sm:$0xff]
    %v243 = vld [vmem:[#allocation7 + $0xc8] sm:$0xff]
    %v244 = vld [vmem:[#allocation7 + $0xd0] sm:$0xff]
    %v245 = vld [vmem:[#allocation7 + $0xd8] sm:$0xff]
    %v246 = vld [vmem:[#allocation7 + $0xe0] sm:$0xff]
    %v247 = vld [vmem:[#allocation7 + $0xe8] sm:$0xff]
    %v248 = vld [vmem:[#allocation7 + $0xf0] sm:$0xff]
    %v249 = vld [vmem:[#allocation7 + $0xf8] sm:$0xff]
    %v250 = vld [vmem:[#allocation7 + $0x100] sm:$0xff]
    %v251 = vld [vmem:[#allocation7 + $0x108] sm:$0xff]
    %v252 = vld [vmem:[#allocation7 + $0x110] sm:$0xff]
    %v253 = vld [vmem:[#allocation7 + $0x118] sm:$0xff]
    %v254 = vld [vmem:[#allocation7 + $0x120] sm:$0xff]
    %v255 = vld [vmem:[#allocation7 + $0x128] sm:$0xff]
    %v256 = vld [vmem:[#allocation7 + $0x130] sm:$0xff]
    %v257 = vld [vmem:[#allocation7 + $0x138] sm:$0xff]
    %v258 = vld [vmem:[#allocation7 + $0x140] sm:$0xff]
    %v259 = vld [vmem:[#allocation7 + $0x148] sm:$0xff]
    %v260 = vld [vmem:[#allocation7 + $0x150] sm:$0xff]
    %v261 = vld [vmem:[#allocation7 + $0x158] sm:$0xff]
    %v262 = vld [vmem:[#allocation7 + $0x160] sm:$0xff]
    %v263 = vld [vmem:[#allocation7 + $0x168] sm:$0xff]
    %v264 = vld [vmem:[#allocation7 + $0x170] sm:$0xff]
    %v265 = vld [vmem:[#allocation7 + $0x178] sm:$0xff]
    %v266 = vld [vmem:[%s6] sm:$0xff]
    %v267 = vld [vmem:[%s6 + $0x8] sm:$0xf]
    %v270 = vlaneseq
    %v271 = vshrl.u32 %v270, 7
    %v272 = vsub.s32 0, %v271
    %v273 = vrot.slane %v266, %v272
    %v274 = vlaneseq
    %v275 = vshrl.u32 %v274, 7
    %v276 = vsub.s32 1, %v275
    %v277 = vrot.slane %v266, %v276
    %v278 = vlaneseq
    %v279 = vshrl.u32 %v278, 7
    %v280 = vsub.s32 2, %v279
    %v281 = vrot.slane %v266, %v280
    %v282 = vlaneseq
    %v283 = vshrl.u32 %v282, 7
    %v284 = vsub.s32 3, %v283
    %v285 = vrot.slane %v266, %v284
    %v286 = vlaneseq
    %v287 = vshrl.u32 %v286, 7
    %v288 = vsub.s32 4, %v287
    %v289 = vrot.slane %v266, %v288
    %v290 = vlaneseq
    %v291 = vshrl.u32 %v290, 7
    %v292 = vsub.s32 5, %v291
    %v293 = vrot.slane %v266, %v292
    %v294 = vlaneseq
    %v295 = vshrl.u32 %v294, 7
    %v296 = vsub.s32 6, %v295
    %v297 = vrot.slane %v266, %v296
    %v298 = vlaneseq
    %v299 = vshrl.u32 %v298, 7
    %v300 = vsub.s32 7, %v299
    %v301 = vrot.slane %v266, %v300
    %v302 = vlaneseq
    %v303 = vshrl.u32 %v302, 7
    %v304 = vsub.s32 0, %v303
    %v305 = vrot.slane %v267, %v304
    %v306 = vlaneseq
    %v307 = vshrl.u32 %v306, 7
    %v308 = vsub.s32 1, %v307
    %v309 = vrot.slane %v267, %v308
    %v310 = vlaneseq
    %v311 = vshrl.u32 %v310, 7
    %v312 = vsub.s32 2, %v311
    %v313 = vrot.slane %v267, %v312
    %v314 = vlaneseq
    %v315 = vshrl.u32 %v314, 7
    %v316 = vsub.s32 3, %v315
    %v317 = vrot.slane %v267, %v316
    %v331 = vsel %vm81, %v216, 0
    %v334 = vsel %vm81, %v217, 0
    %336 = vmatprep.subr.mxu0 %v219
    %337 = vmatpush1.msra.mxu0 %v218
    %338 = vmatprep.subr.mxu0 %v231
    %339 = vmatpush1.msra.mxu0 %v230
    %340 = vmatprep.subr.mxu0 %v243
    %341 = vmatpush1.msra.mxu0 %v242
    %342 = vmatprep.subr.mxu0 %v255
    %343 = vmatpush1.msra.mxu0 %v254
    %344 = vmatprep.subr.mxu0 0.0
    %345 = vmatpush1.msra.mxu0 0.0
    %346 = vmatprep.subr.mxu0 0.0
    %347 = vmatpush1.msra.mxu0 0.0
    %348 = vmatprep.subr.mxu0 0.0
    %349 = vmatpush1.msra.mxu0 0.0
    %350 = vmatprep.subr.mxu0 0.0
    %351 = vmatpush1.msra.mxu0 0.0
    %352 = vmatprep.subr.mxu0 0.0
    %353 = vmatpush1.msra.mxu0 0.0
    %354 = vmatprep.subr.mxu0 0.0
    %355 = vmatpush1.msra.mxu0 0.0
    %356 = vmatprep.subr.mxu0 0.0
    %357 = vmatpush1.msra.mxu0 0.0
    %358 = vmatprep.subr.mxu0 0.0
    %359 = vmatpush1.msra.mxu0 0.0
    %360 = vmatprep.subr.mxu0 0.0
    %361 = vmatpush1.msra.mxu0 0.0
    %362 = vmatprep.subr.mxu0 0.0
    %363 = vmatpush1.msra.mxu0 0.0
    %364 = vmatprep.subr.mxu0 0.0
    %365 = vmatpush1.msra.mxu0 0.0
    %366 = vmatprep.subr.mxu0 0.0
    %367 = vmatpush1.msra.mxu0 0.0
    %368 = vmatprep.subr.mxu0 0.0
    %369 = vmatpush1.msra.mxu0 0.0
    %370 = vmatprep.subr.mxu0 0.0
    %371 = vmatpush1.msra.mxu0 0.0
    %372 = vmatprep.subr.mxu0 0.0
    %373 = vmatpush1.msra.mxu0 0.0
    %374 = vmatprep.subr.mxu0 0.0
    %375 = vmatpush1.msra.mxu0 0.0
    %376 = vmatprep.subr.mxu0 0.0
    %377 = vmatpush1.msra.mxu0 0.0
    %378 = vmatprep.subr.mxu0 0.0
    %379 = vmatpush1.msra.mxu0 0.0
    %380 = vmatprep.subr.mxu0 0.0
    %381 = vmatpush1.msra.mxu0 0.0
    %382 = vmatprep.subr.mxu0 0.0
    %383 = vmatpush1.msra.mxu0 0.0
    %384 = vmatprep.subr.mxu0 0.0
    %385 = vmatpush1.msra.mxu0 0.0
    %386 = vmatprep.subr.mxu0 0.0
    %387 = vmatpush1.msra.mxu0 0.0
    %388 = vmatprep.subr.mxu0 0.0
    %389 = vmatpush1.msra.mxu0 0.0
    %390 = vmatprep.subr.mxu0 0.0
    %391 = vmatpush1.msra.mxu0 0.0
    %392 = vmatprep.subr.mxu0 0.0
    %393 = vmatpush1.msra.mxu0 0.0
    %394 = vmatprep.subr.mxu0 0.0
    %395 = vmatpush1.msra.mxu0 0.0
    %396 = vmatprep.subr.mxu0 0.0
    %397 = vmatpush1.msra.mxu0 0.0
    %398 = vmatprep.subr.mxu0 0.0
    %399 = vmatpush1.msra.mxu0 0.0
    %400 = vmatprep.mubr.f32.mxu0 0.0
    %401 = vmatmul.mubr.f32.gmra.mrb[0].mxu0 %v331
    %v402 = vpop.f32.mrb[0].mxu0
    %v403 = vadd.f32 %v273, %v402
    %v404 = vpop.f32.mrb[0].mxu0
    %v405 = vadd.f32 %v277, %v404
    %406 = vmatprep.mubr.f32.mxu0 0.0
    %407 = vmatmul.mubr.f32.gmra.mrb[0].mxu0 %v334
    %v408 = vpop.f32.mrb[0].mxu0
    %v409 = vadd.f32 %v273, %v408
    %v410 = vpop.f32.mrb[0].mxu0
    %v411 = vadd.f32 %v277, %v410
    %412 = vdwg.mxu0
    %413 = vmatprep.subr.mxu0 %v221
    %414 = vmatpush1.msra.mxu0 %v220
    %415 = vmatprep.subr.mxu0 %v233
    %416 = vmatpush1.msra.mxu0 %v232
    %417 = vmatprep.subr.mxu0 %v245
    %418 = vmatpush1.msra.mxu0 %v244
    %419 = vmatprep.subr.mxu0 %v257
    %420 = vmatpush1.msra.mxu0 %v256
    %421 = vmatprep.subr.mxu0 0.0
    %422 = vmatpush1.msra.mxu0 0.0
    %423 = vmatprep.subr.mxu0 0.0
    %424 = vmatpush1.msra.mxu0 0.0
    %425 = vmatprep.subr.mxu0 0.0
    %426 = vmatpush1.msra.mxu0 0.0
    %427 = vmatprep.subr.mxu0 0.0
    %428 = vmatpush1.msra.mxu0 0.0
    %429 = vmatprep.subr.mxu0 0.0
    %430 = vmatpush1.msra.mxu0 0.0
    %431 = vmatprep.subr.mxu0 0.0
    %432 = vmatpush1.msra.mxu0 0.0
    %433 = vmatprep.subr.mxu0 0.0
    %434 = vmatpush1.msra.mxu0 0.0
    %435 = vmatprep.subr.mxu0 0.0
    %436 = vmatpush1.msra.mxu0 0.0
    %437 = vmatprep.subr.mxu0 0.0
    %438 = vmatpush1.msra.mxu0 0.0
    %439 = vmatprep.subr.mxu0 0.0
    %440 = vmatpush1.msra.mxu0 0.0
    %441 = vmatprep.subr.mxu0 0.0
    %442 = vmatpush1.msra.mxu0 0.0
    %443 = vmatprep.subr.mxu0 0.0
    %444 = vmatpush1.msra.mxu0 0.0
    %445 = vmatprep.subr.mxu0 0.0
    %446 = vmatpush1.msra.mxu0 0.0
    %447 = vmatprep.subr.mxu0 0.0
    %448 = vmatpush1.msra.mxu0 0.0
    %449 = vmatprep.subr.mxu0 0.0
    %450 = vmatpush1.msra.mxu0 0.0
    %451 = vmatprep.subr.mxu0 0.0
    %452 = vmatpush1.msra.mxu0 0.0
    %453 = vmatprep.subr.mxu0 0.0
    %454 = vmatpush1.msra.mxu0 0.0
    %455 = vmatprep.subr.mxu0 0.0
    %456 = vmatpush1.msra.mxu0 0.0
    %457 = vmatprep.subr.mxu0 0.0
    %458 = vmatpush1.msra.mxu0 0.0
    %459 = vmatprep.subr.mxu0 0.0
    %460 = vmatpush1.msra.mxu0 0.0
    %461 = vmatprep.subr.mxu0 0.0
    %462 = vmatpush1.msra.mxu0 0.0
    %463 = vmatprep.subr.mxu0 0.0
    %464 = vmatpush1.msra.mxu0 0.0
    %465 = vmatprep.subr.mxu0 0.0
    %466 = vmatpush1.msra.mxu0 0.0
    %467 = vmatprep.subr.mxu0 0.0
    %468 = vmatpush1.msra.mxu0 0.0
    %469 = vmatprep.subr.mxu0 0.0
    %470 = vmatpush1.msra.mxu0 0.0
    %471 = vmatprep.subr.mxu0 0.0
    %472 = vmatpush1.msra.mxu0 0.0
    %473 = vmatprep.subr.mxu0 0.0
    %474 = vmatpush1.msra.mxu0 0.0
    %475 = vmatprep.subr.mxu0 0.0
    %476 = vmatpush1.msra.mxu0 0.0
    %477 = vmatprep.mubr.f32.mxu0 0.0
    %478 = vmatmul.mubr.f32.gmra.mrb[0].mxu0 %v331
    %v479 = vpop.f32.mrb[0].mxu0
    %v480 = vadd.f32 %v281, %v479
    %v481 = vpop.f32.mrb[0].mxu0
    %v482 = vadd.f32 %v285, %v481
    %483 = vmatprep.mubr.f32.mxu0 0.0
    %484 = vmatmul.mubr.f32.gmra.mrb[0].mxu0 %v334
    %v485 = vpop.f32.mrb[0].mxu0
    %v486 = vadd.f32 %v281, %v485
    %v487 = vpop.f32.mrb[0].mxu0
    %v488 = vadd.f32 %v285, %v487
    %489 = vdwg.mxu0
    %490 = vmatprep.subr.mxu0 %v223
    %491 = vmatpush1.msra.mxu0 %v222
    %492 = vmatprep.subr.mxu0 %v235
    %493 = vmatpush1.msra.mxu0 %v234
    %494 = vmatprep.subr.mxu0 %v247
    %495 = vmatpush1.msra.mxu0 %v246
    %496 = vmatprep.subr.mxu0 %v259
    %497 = vmatpush1.msra.mxu0 %v258
    %498 = vmatprep.subr.mxu0 0.0
    %499 = vmatpush1.msra.mxu0 0.0
    %500 = vmatprep.subr.mxu0 0.0
    %501 = vmatpush1.msra.mxu0 0.0
    %502 = vmatprep.subr.mxu0 0.0
    %503 = vmatpush1.msra.mxu0 0.0
    %504 = vmatprep.subr.mxu0 0.0
    %505 = vmatpush1.msra.mxu0 0.0
    %506 = vmatprep.subr.mxu0 0.0
    %507 = vmatpush1.msra.mxu0 0.0
    %508 = vmatprep.subr.mxu0 0.0
    %509 = vmatpush1.msra.mxu0 0.0
    %510 = vmatprep.subr.mxu0 0.0
    %511 = vmatpush1.msra.mxu0 0.0
    %512 = vmatprep.subr.mxu0 0.0
    %513 = vmatpush1.msra.mxu0 0.0
    %514 = vmatprep.subr.mxu0 0.0
    %515 = vmatpush1.msra.mxu0 0.0
    %516 = vmatprep.subr.mxu0 0.0
    %517 = vmatpush1.msra.mxu0 0.0
    %518 = vmatprep.subr.mxu0 0.0
    %519 = vmatpush1.msra.mxu0 0.0
    %520 = vmatprep.subr.mxu0 0.0
    %521 = vmatpush1.msra.mxu0 0.0
    %522 = vmatprep.subr.mxu0 0.0
    %523 = vmatpush1.msra.mxu0 0.0
    %524 = vmatprep.subr.mxu0 0.0
    %525 = vmatpush1.msra.mxu0 0.0
    %526 = vmatprep.subr.mxu0 0.0
    %527 = vmatpush1.msra.mxu0 0.0
    %528 = vmatprep.subr.mxu0 0.0
    %529 = vmatpush1.msra.mxu0 0.0
    %530 = vmatprep.subr.mxu0 0.0
    %531 = vmatpush1.msra.mxu0 0.0
    %532 = vmatprep.subr.mxu0 0.0
    %533 = vmatpush1.msra.mxu0 0.0
    %534 = vmatprep.subr.mxu0 0.0
    %535 = vmatpush1.msra.mxu0 0.0
    %536 = vmatprep.subr.mxu0 0.0
    %537 = vmatpush1.msra.mxu0 0.0
    %538 = vmatprep.subr.mxu0 0.0
    %539 = vmatpush1.msra.mxu0 0.0
    %540 = vmatprep.subr.mxu0 0.0
    %541 = vmatpush1.msra.mxu0 0.0
    %542 = vmatprep.subr.mxu0 0.0
    %543 = vmatpush1.msra.mxu0 0.0
    %544 = vmatprep.subr.mxu0 0.0
    %545 = vmatpush1.msra.mxu0 0.0
    %546 = vmatprep.subr.mxu0 0.0
    %547 = vmatpush1.msra.mxu0 0.0
    %548 = vmatprep.subr.mxu0 0.0
    %549 = vmatpush1.msra.mxu0 0.0
    %550 = vmatprep.subr.mxu0 0.0
    %551 = vmatpush1.msra.mxu0 0.0
    %552 = vmatprep.subr.mxu0 0.0
    %553 = vmatpush1.msra.mxu0 0.0
    %554 = vmatprep.mubr.f32.mxu0 0.0
    %555 = vmatmul.mubr.f32.gmra.mrb[0].mxu0 %v331
    %v556 = vpop.f32.mrb[0].mxu0
    %v557 = vadd.f32 %v289, %v556
    %v558 = vpop.f32.mrb[0].mxu0
    %v559 = vadd.f32 %v293, %v558
    %560 = vmatprep.mubr.f32.mxu0 0.0
    %561 = vmatmul.mubr.f32.gmra.mrb[0].mxu0 %v334
    %v562 = vpop.f32.mrb[0].mxu0
    %v563 = vadd.f32 %v289, %v562
    %v564 = vpop.f32.mrb[0].mxu0
    %v565 = vadd.f32 %v293, %v564
    %566 = vdwg.mxu0
    %567 = vmatprep.subr.mxu0 %v225
    %568 = vmatpush1.msra.mxu0 %v224
    %569 = vmatprep.subr.mxu0 %v237
    %570 = vmatpush1.msra.mxu0 %v236
    %571 = vmatprep.subr.mxu0 %v249
    %572 = vmatpush1.msra.mxu0 %v248
    %573 = vmatprep.subr.mxu0 %v261
    %574 = vmatpush1.msra.mxu0 %v260
    %575 = vmatprep.subr.mxu0 0.0
    %576 = vmatpush1.msra.mxu0 0.0
    %577 = vmatprep.subr.mxu0 0.0
    %578 = vmatpush1.msra.mxu0 0.0
    %579 = vmatprep.subr.mxu0 0.0
    %580 = vmatpush1.msra.mxu0 0.0
    %581 = vmatprep.subr.mxu0 0.0
    %582 = vmatpush1.msra.mxu0 0.0
    %583 = vmatprep.subr.mxu0 0.0
    %584 = vmatpush1.msra.mxu0 0.0
    %585 = vmatprep.subr.mxu0 0.0
    %586 = vmatpush1.msra.mxu0 0.0
    %587 = vmatprep.subr.mxu0 0.0
    %588 = vmatpush1.msra.mxu0 0.0
    %589 = vmatprep.subr.mxu0 0.0
    %590 = vmatpush1.msra.mxu0 0.0
    %591 = vmatprep.subr.mxu0 0.0
    %592 = vmatpush1.msra.mxu0 0.0
    %593 = vmatprep.subr.mxu0 0.0
    %594 = vmatpush1.msra.mxu0 0.0
    %595 = vmatprep.subr.mxu0 0.0
    %596 = vmatpush1.msra.mxu0 0.0
    %597 = vmatprep.subr.mxu0 0.0
    %598 = vmatpush1.msra.mxu0 0.0
    %599 = vmatprep.subr.mxu0 0.0
    %600 = vmatpush1.msra.mxu0 0.0
    %601 = vmatprep.subr.mxu0 0.0
    %602 = vmatpush1.msra.mxu0 0.0
    %603 = vmatprep.subr.mxu0 0.0
    %604 = vmatpush1.msra.mxu0 0.0
    %605 = vmatprep.subr.mxu0 0.0
    %606 = vmatpush1.msra.mxu0 0.0
    %607 = vmatprep.subr.mxu0 0.0
    %608 = vmatpush1.msra.mxu0 0.0
    %609 = vmatprep.subr.mxu0 0.0
    %610 = vmatpush1.msra.mxu0 0.0
    %611 = vmatprep.subr.mxu0 0.0
    %612 = vmatpush1.msra.mxu0 0.0
    %613 = vmatprep.subr.mxu0 0.0
    %614 = vmatpush1.msra.mxu0 0.0
    %615 = vmatprep.subr.mxu0 0.0
    %616 = vmatpush1.msra.mxu0 0.0
    %617 = vmatprep.subr.mxu0 0.0
    %618 = vmatpush1.msra.mxu0 0.0
    %619 = vmatprep.subr.mxu0 0.0
    %620 = vmatpush1.msra.mxu0 0.0
    %621 = vmatprep.subr.mxu0 0.0
    %622 = vmatpush1.msra.mxu0 0.0
    %623 = vmatprep.subr.mxu0 0.0
    %624 = vmatpush1.msra.mxu0 0.0
    %625 = vmatprep.subr.mxu0 0.0
    %626 = vmatpush1.msra.mxu0 0.0
    %627 = vmatprep.subr.mxu0 0.0
    %628 = vmatpush1.msra.mxu0 0.0
    %629 = vmatprep.subr.mxu0 0.0
    %630 = vmatpush1.msra.mxu0 0.0
    %631 = vmatprep.mubr.f32.mxu0 0.0
    %632 = vmatmul.mubr.f32.gmra.mrb[0].mxu0 %v331
    %v633 = vpop.f32.mrb[0].mxu0
    %v634 = vadd.f32 %v297, %v633
    %v635 = vpop.f32.mrb[0].mxu0
    %v636 = vadd.f32 %v301, %v635
    %637 = vmatprep.mubr.f32.mxu0 0.0
    %638 = vmatmul.mubr.f32.gmra.mrb[0].mxu0 %v334
    %v639 = vpop.f32.mrb[0].mxu0
    %v640 = vadd.f32 %v297, %v639
    %v641 = vpop.f32.mrb[0].mxu0
    %v642 = vadd.f32 %v301, %v641
    %643 = vdwg.mxu0
    %644 = vmatprep.subr.mxu0 %v227
    %645 = vmatpush1.msra.mxu0 %v226
    %646 = vmatprep.subr.mxu0 %v239
    %647 = vmatpush1.msra.mxu0 %v238
    %648 = vmatprep.subr.mxu0 %v251
    %649 = vmatpush1.msra.mxu0 %v250
    %650 = vmatprep.subr.mxu0 %v263
    %651 = vmatpush1.msra.mxu0 %v262
    %652 = vmatprep.subr.mxu0 0.0
    %653 = vmatpush1.msra.mxu0 0.0
    %654 = vmatprep.subr.mxu0 0.0
    %655 = vmatpush1.msra.mxu0 0.0
    %656 = vmatprep.subr.mxu0 0.0
    %657 = vmatpush1.msra.mxu0 0.0
    %658 = vmatprep.subr.mxu0 0.0
    %659 = vmatpush1.msra.mxu0 0.0
    %660 = vmatprep.subr.mxu0 0.0
    %661 = vmatpush1.msra.mxu0 0.0
    %662 = vmatprep.subr.mxu0 0.0
    %663 = vmatpush1.msra.mxu0 0.0
    %664 = vmatprep.subr.mxu0 0.0
    %665 = vmatpush1.msra.mxu0 0.0
    %666 = vmatprep.subr.mxu0 0.0
    %667 = vmatpush1.msra.mxu0 0.0
    %668 = vmatprep.subr.mxu0 0.0
    %669 = vmatpush1.msra.mxu0 0.0
    %670 = vmatprep.subr.mxu0 0.0
    %671 = vmatpush1.msra.mxu0 0.0
    %672 = vmatprep.subr.mxu0 0.0
    %673 = vmatpush1.msra.mxu0 0.0
    %674 = vmatprep.subr.mxu0 0.0
    %675 = vmatpush1.msra.mxu0 0.0
    %676 = vmatprep.subr.mxu0 0.0
    %677 = vmatpush1.msra.mxu0 0.0
    %678 = vmatprep.subr.mxu0 0.0
    %679 = vmatpush1.msra.mxu0 0.0
    %680 = vmatprep.subr.mxu0 0.0
    %681 = vmatpush1.msra.mxu0 0.0
    %682 = vmatprep.subr.mxu0 0.0
    %683 = vmatpush1.msra.mxu0 0.0
    %684 = vmatprep.subr.mxu0 0.0
    %685 = vmatpush1.msra.mxu0 0.0
    %686 = vmatprep.subr.mxu0 0.0
    %687 = vmatpush1.msra.mxu0 0.0
    %688 = vmatprep.subr.mxu0 0.0
    %689 = vmatpush1.msra.mxu0 0.0
    %690 = vmatprep.subr.mxu0 0.0
    %691 = vmatpush1.msra.mxu0 0.0
    %692 = vmatprep.subr.mxu0 0.0
    %693 = vmatpush1.msra.mxu0 0.0
    %694 = vmatprep.subr.mxu0 0.0
    %695 = vmatpush1.msra.mxu0 0.0
    %696 = vmatprep.subr.mxu0 0.0
    %697 = vmatpush1.msra.mxu0 0.0
    %698 = vmatprep.subr.mxu0 0.0
    %699 = vmatpush1.msra.mxu0 0.0
    %700 = vmatprep.subr.mxu0 0.0
    %701 = vmatpush1.msra.mxu0 0.0
    %702 = vmatprep.subr.mxu0 0.0
    %703 = vmatpush1.msra.mxu0 0.0
    %704 = vmatprep.subr.mxu0 0.0
    %705 = vmatpush1.msra.mxu0 0.0
    %706 = vmatprep.subr.mxu0 0.0
    %707 = vmatpush1.msra.mxu0 0.0
    %708 = vmatprep.mubr.f32.mxu0 0.0
    %709 = vmatmul.mubr.f32.gmra.mrb[0].mxu0 %v331
    %v710 = vpop.f32.mrb[0].mxu0
    %v711 = vadd.f32 %v305, %v710
    %v712 = vpop.f32.mrb[0].mxu0
    %v713 = vadd.f32 %v309, %v712
    %714 = vmatprep.mubr.f32.mxu0 0.0
    %715 = vmatmul.mubr.f32.gmra.mrb[0].mxu0 %v334
    %v716 = vpop.f32.mrb[0].mxu0
    %v717 = vadd.f32 %v305, %v716
    %v718 = vpop.f32.mrb[0].mxu0
    %v719 = vadd.f32 %v309, %v718
    %720 = vdwg.mxu0
    %721 = vmatprep.subr.mxu0 %v229
    %722 = vmatpush1.msra.mxu0 %v228
    %723 = vmatprep.subr.mxu0 %v241
    %724 = vmatpush1.msra.mxu0 %v240
    %725 = vmatprep.subr.mxu0 %v253
    %726 = vmatpush1.msra.mxu0 %v252
    %727 = vmatprep.subr.mxu0 %v265
    %728 = vmatpush1.msra.mxu0 %v264
    %729 = vmatprep.subr.mxu0 0.0
    %730 = vmatpush1.msra.mxu0 0.0
    %731 = vmatprep.subr.mxu0 0.0
    %732 = vmatpush1.msra.mxu0 0.0
    %733 = vmatprep.subr.mxu0 0.0
    %734 = vmatpush1.msra.mxu0 0.0
    %735 = vmatprep.subr.mxu0 0.0
    %736 = vmatpush1.msra.mxu0 0.0
    %737 = vmatprep.subr.mxu0 0.0
    %738 = vmatpush1.msra.mxu0 0.0
    %739 = vmatprep.subr.mxu0 0.0
    %740 = vmatpush1.msra.mxu0 0.0
    %741 = vmatprep.subr.mxu0 0.0
    %742 = vmatpush1.msra.mxu0 0.0
    %743 = vmatprep.subr.mxu0 0.0
    %744 = vmatpush1.msra.mxu0 0.0
    %745 = vmatprep.subr.mxu0 0.0
    %746 = vmatpush1.msra.mxu0 0.0
    %747 = vmatprep.subr.mxu0 0.0
    %748 = vmatpush1.msra.mxu0 0.0
    %749 = vmatprep.subr.mxu0 0.0
    %750 = vmatpush1.msra.mxu0 0.0
    %751 = vmatprep.subr.mxu0 0.0
    %752 = vmatpush1.msra.mxu0 0.0
    %753 = vmatprep.subr.mxu0 0.0
    %754 = vmatpush1.msra.mxu0 0.0
    %755 = vmatprep.subr.mxu0 0.0
    %756 = vmatpush1.msra.mxu0 0.0
    %757 = vmatprep.subr.mxu0 0.0
    %758 = vmatpush1.msra.mxu0 0.0
    %759 = vmatprep.subr.mxu0 0.0
    %760 = vmatpush1.msra.mxu0 0.0
    %761 = vmatprep.subr.mxu0 0.0
    %762 = vmatpush1.msra.mxu0 0.0
    %763 = vmatprep.subr.mxu0 0.0
    %764 = vmatpush1.msra.mxu0 0.0
    %765 = vmatprep.subr.mxu0 0.0
    %766 = vmatpush1.msra.mxu0 0.0
    %767 = vmatprep.subr.mxu0 0.0
    %768 = vmatpush1.msra.mxu0 0.0
    %769 = vmatprep.subr.mxu0 0.0
    %770 = vmatpush1.msra.mxu0 0.0
    %771 = vmatprep.subr.mxu0 0.0
    %772 = vmatpush1.msra.mxu0 0.0
    %773 = vmatprep.subr.mxu0 0.0
    %774 = vmatpush1.msra.mxu0 0.0
    %775 = vmatprep.subr.mxu0 0.0
    %776 = vmatpush1.msra.mxu0 0.0
    %777 = vmatprep.subr.mxu0 0.0
    %778 = vmatpush1.msra.mxu0 0.0
    %779 = vmatprep.subr.mxu0 0.0
    %780 = vmatpush1.msra.mxu0 0.0
    %781 = vmatprep.subr.mxu0 0.0
    %782 = vmatpush1.msra.mxu0 0.0
    %783 = vmatprep.subr.mxu0 0.0
    %784 = vmatpush1.msra.mxu0 0.0
    %785 = vmatprep.mubr.f32.mxu0 0.0
    %786 = vmatmul.mubr.f32.gmra.mrb[0].mxu0 %v331
    %v787 = vpop.f32.mrb[0].mxu0
    %v788 = vadd.f32 %v313, %v787
    %v789 = vpop.f32.mrb[0].mxu0
    %v790 = vadd.f32 %v317, %v789
    %791 = vmatprep.mubr.f32.mxu0 0.0
    %792 = vmatmul.mubr.f32.gmra.mrb[0].mxu0 %v334
    %v793 = vpop.f32.mrb[0].mxu0
    %v794 = vadd.f32 %v313, %v793
    %v795 = vpop.f32.mrb[0].mxu0
    %v796 = vadd.f32 %v317, %v795
    %797 = vdwg.mxu0
    %798 = vst [vmem:[#allocation8] sm:$0xff] %v403
    %799 = vst [vmem:[#allocation8 + $0x8] sm:$0xff] %v405
    %800 = vst [vmem:[#allocation8 + $0x10] sm:$0xff] %v480
    %801 = vst [vmem:[#allocation8 + $0x18] sm:$0xff] %v482
    %802 = vst [vmem:[#allocation8 + $0x20] sm:$0xff] %v557
    %803 = vst [vmem:[#allocation8 + $0x28] sm:$0xff] %v559
    %804 = vst [vmem:[#allocation8 + $0x30] sm:$0xff] %v634
    %805 = vst [vmem:[#allocation8 + $0x38] sm:$0xff] %v636
    %806 = vst [vmem:[#allocation8 + $0x40] sm:$0xff] %v711
    %807 = vst [vmem:[#allocation8 + $0x48] sm:$0xff] %v713
    %808 = vst [vmem:[#allocation8 + $0x50] sm:$0xff] %v788
    %809 = vst [vmem:[#allocation8 + $0x58] sm:$0xff] %v790
    %810 = vst [vmem:[#allocation8 + $0x60] sm:$0xff] %v409
    %811 = vst [vmem:[#allocation8 + $0x68] sm:$0xff] %v411
    %812 = vst [vmem:[#allocation8 + $0x70] sm:$0xff] %v486
    %813 = vst [vmem:[#allocation8 + $0x78] sm:$0xff] %v488
    %814 = vst [vmem:[#allocation8 + $0x80] sm:$0xff] %v563
    %815 = vst [vmem:[#allocation8 + $0x88] sm:$0xff] %v565
    %816 = vst [vmem:[#allocation8 + $0x90] sm:$0xff] %v640
    %817 = vst [vmem:[#allocation8 + $0x98] sm:$0xff] %v642
    %818 = vst [vmem:[#allocation8 + $0xa0] sm:$0xff] %v717
    %819 = vst [vmem:[#allocation8 + $0xa8] sm:$0xff] %v719
    %820 = vst [vmem:[#allocation8 + $0xb0] sm:$0xff] %v794
    %821 = vst [vmem:[#allocation8 + $0xb8] sm:$0xff] %v796
    // Predicated region
    $region42: #{tpu_custom_call.1} parent=1 // pred_check
      _
    $region43: #{tpu_custom_call.1} parent=1 // pred_check_branch
      %823 = sbr.rel (0) target = $region45
    $region44: #{tpu_custom_call.1} parent=1 // pred_region
      %s825 = ssub.s32 3072, 3072
      %826 = vsyncadd [#allocation4], %s825
      %s827 = sshll.u32 [#allocation8], 4
      %s828 = int_to_ptr.vmem [resolvable:$true] %s827
      %833 = dma.vmem_to_hbm [thread:$0]  %s828, 3072, %s7, [#allocation4], 1536, 1536, 96
    $region45: #{tpu_custom_call.1} parent=1 // pred_fallthru
      _
    // Predicated region
    $region46: #{tpu_custom_call.1} parent=1 // pred_check
      _
    $region47: #{tpu_custom_call.1} parent=1 // pred_check_branch
      %835 = sbr.rel (0) target = $region49
    $region48: #{tpu_custom_call.1} parent=1 // pred_region
      %836 = dma.done [#allocation4], 3072
    $region49: #{tpu_custom_call.1} parent=1 // pred_fallthru
      _
    %837 = vsyncpa [#allocation3], 1
    %838 = vsyncpa [#allocation6], 1
    %839 = vsyncpa [#allocation4], 1

</llo_original>
